<compile_context>
chip_gen: v7x
topology: tpu7x:2x2x1
jax: 0.10.0
libtpu: 0.0.40
codegen_flags: <defaults>
</compile_context>

<pallas_src>
import functools

import jax
import jax.numpy as jnp
from jax.experimental import pallas as pl
from jax.experimental.pallas import tpu as pltpu


def _focal_loss_kernel(x_ref, t_ref, out_ref, acc_ref, *, gamma, eps, mask_padding):
    """One grid step handles a (tn, C) tile of rows.

    Grid is (num_cores, blocks_per_core). Axis 0 is 'parallel' (each core owns
    its own (1, 1, 1) partial-sum output block); axis 1 is the serial
    reduction. Per-row losses accumulate into a VMEM scratch; the cross-sublane
    reduce + scalar store happens once per core in the epilogue.
    """
    i = pl.program_id(1)

    @pl.when(i == 0)
    def _():
        acc_ref[...] = jnp.zeros_like(acc_ref)

    x = x_ref[...].astype(jnp.float32)              # (tn, C)
    tgt = t_ref[...]                                # (tn, 1) int32; -1 => padded row

    # Row-wise softmax pieces; exp(x - m) is the only full-tile transcendental.
    m = jnp.max(x, axis=1, keepdims=True)           # (tn, 1)
    e = jnp.exp(x - m)                              # (tn, C)
    se = jnp.sum(e, axis=1, keepdims=True)          # (tn, 1), >= 1

    # Gather exp at the target class via a one-hot select (no dynamic lane
    # gather on TPU).  The iota is (1, C); the compare broadcasts against the
    # (tn, 1) target, so no full-tile iota is materialized.
    col = jax.lax.broadcasted_iota(jnp.int32, (1, x.shape[1]), 1)
    e_t = jnp.sum(jnp.where(col == tgt, e, 0.0), axis=1, keepdims=True)  # (tn, 1)

    # p at the target class, with the module's eps clamp applied before both
    # the log and the (1 - p_t)**gamma weight.  Exact division (no approx recip).
    pt = jnp.clip(e_t / se, eps, 1.0 - eps)          # (tn, 1)
    nll = -jnp.log(pt)

    one_m_pt = 1.0 - pt
    if gamma == 0.0:
        loss = nll
    elif gamma == 1.0:
        loss = nll * one_m_pt
    elif gamma == 2.0:
        loss = nll * (one_m_pt * one_m_pt)
    elif gamma == 3.0:
        loss = nll * (one_m_pt * one_m_pt * one_m_pt)
    else:
        loss = nll * jnp.power(one_m_pt, jnp.float32(gamma))

    if mask_padding:
        # Padded rows carry target == -1; zero their contribution.
        loss = jnp.where(tgt >= 0, loss, 0.0)

    acc_ref[...] += loss

    @pl.when(i == pl.num_programs(1) - 1)
    def _():
        out_ref[...] = jnp.zeros_like(out_ref) + jnp.sum(acc_ref[...])


def _chip_defaults():
    """Returns (vmem_capacity_bytes, num_tensorcores) with safe fallbacks."""
    vmem_bytes = 128 << 20
    num_cores = 1
    try:
        info = pltpu.get_tpu_info()
        for attr in ("vmem_capacity_bytes", "vmem_bytes"):
            v = getattr(info, attr, None)
            if isinstance(v, int) and v > 0:
                vmem_bytes = v
                break
        cores = None
        for attr in ("num_cores", "core_count", "tensorcore_count", "num_tensorcores"):
            v = getattr(info, attr, None)
            if isinstance(v, int) and v > 0:
                cores = v
                break
        if cores is None:
            # Heuristic: 64 MiB/TC VMEM chips (v7x) have 2 TensorCores per chip.
            cores = 2 if vmem_bytes <= (64 << 20) else 1
        num_cores = cores
    except Exception:
        pass
    return vmem_bytes, num_cores


def focal_loss(logits, target, *, gamma=0.0, eps=1e-7, tn=None, num_cores=None,
               target_tile_bytes=None):
    """logits: (N, C) float (f32 or bf16); target: (N,) int.

    Returns scalar f32 sum-reduced focal loss.
    """
    N, C = logits.shape
    itemsize = jnp.dtype(logits.dtype).itemsize
    sublane = max(8, 32 // itemsize)                 # 8 rows f32, 16 rows bf16
    lane_col_bytes = 128 * 4                         # a (.,1) 32-bit column pads to 128 lanes

    vmem_bytes, chip_cores = _chip_defaults()
    if num_cores is None:
        num_cores = chip_cores
    P = max(1, int(num_cores))

    small_vmem = vmem_bytes <= (64 << 20)            # v7x-class: 64 MiB / TensorCore
    if target_tile_bytes is None:
        # HBM-bandwidth-bound kernel: amortize the ~0.35us per-grid-step overhead.
        target_tile_bytes = (8 << 20) if small_vmem else (16 << 20)
    vmem_cap = (48 << 20) if small_vmem else (96 << 20)

    # ---- pick row tile: big enough to amortize per-step overhead, small enough
    # ---- that double-buffered logits + lane-padded target columns + the per-row
    # ---- accumulator scratch stay well inside VMEM. Always sublane-aligned. ----
    n_rounded = ((N + sublane - 1) // sublane) * sublane
    if tn is None:
        per_row_hbm = C * itemsize + 4
        per_row_vmem = 2 * C * itemsize + 3 * lane_col_bytes   # 2x logits, 2x tgt, 1x acc
        tn_hbm = target_tile_bytes // max(1, per_row_hbm)
        tn_vmem = (vmem_cap - (8 << 20)) // per_row_vmem
        tn = min(tn_hbm, tn_vmem, n_rounded)
    tn = max(sublane, (tn // sublane) * sublane)
    tn = min(tn, n_rounded)

    # ---- pad N so the block count is a multiple of num_cores (robust 2-TC split,
    # ---- no giant un-pipelined fallback for awkward N). Padded rows get target
    # ---- == -1 and are masked in the kernel. ----
    nblocks = -(-N // tn)
    nblocks = -(-nblocks // P) * P
    bpc = nblocks // P
    n_pad = nblocks * tn

    target = target.astype(jnp.int32)
    if n_pad != N:
        logits = jnp.pad(logits, ((0, n_pad - N), (0, 0)))
        target = jnp.pad(target, ((0, n_pad - N),), constant_values=-1)
    t2 = target.reshape(n_pad, 1)

    # VMEM budget: double-buffered logits tile + double-buffered (lane-padded)
    # target column + per-row accumulator scratch + headroom.
    tile_bytes = tn * C * itemsize
    needed = 2 * tile_bytes + 3 * tn * lane_col_bytes + (1 << 16)
    vmem_limit = max(needed + (4 << 20), 16 << 20)
    vmem_limit = min(vmem_limit, max(vmem_bytes - (4 << 20), needed + (1 << 20)))

    cost = pl.CostEstimate(
        flops=6 * n_pad * C + 12 * n_pad,
        transcendentals=n_pad * C + n_pad,
        bytes_accessed=n_pad * C * itemsize + n_pad * 4 + P * 4,
    )

    def idx(c, i):
        return (c * bpc + i, 0)

    kernel = functools.partial(
        _focal_loss_kernel, gamma=float(gamma), eps=float(eps),
        mask_padding=(n_pad != N))

    partials = pl.pallas_call(
        kernel,
        out_shape=jax.ShapeDtypeStruct((P, 1, 1), jnp.float32),
        grid=(P, bpc),
        in_specs=[
            pl.BlockSpec((tn, C), idx),                      # logits tile
            pl.BlockSpec((tn, 1), idx),                      # target column (VMEM)
        ],
        out_specs=pl.BlockSpec((1, 1, 1), lambda c, i: (c, 0, 0)),  # per-core partial
        scratch_shapes=[pltpu.VMEM((tn, 1), jnp.float32)],   # per-row loss accumulator
        compiler_params=pltpu.CompilerParams(
            dimension_semantics=("parallel", "arbitrary"),
            vmem_limit_bytes=int(vmem_limit),
        ),
        cost_estimate=cost,
    )(logits, t2)
    return jnp.sum(partials)


def _focal_loss_ref(logits, target, gamma=0.0, eps=1e-7):
    p = jax.nn.softmax(logits.astype(jnp.float32), axis=1)
    p = jnp.clip(p, eps, 1.0 - eps)
    logp = jnp.log(p)
    pt = jnp.take_along_axis(p, target[:, None], axis=1)[:, 0]
    logpt = jnp.take_along_axis(logp, target[:, None], axis=1)[:, 0]
    return jnp.sum(-logpt * (1.0 - pt) ** gamma)


if __name__ == "__main__":
    key = jax.random.PRNGKey(0)
    gamma, eps = 2.0, 1e-7

    # Case 1: small lane-padded C (32 < 128), default (auto) tiling.
    N, C = 16, 32
    k1, k2 = jax.random.split(key)
    logits = jax.random.normal(k1, (N, C), dtype=jnp.float32)
    target = jax.random.randint(k2, (N,), 0, C, dtype=jnp.int32)
    out = jax.block_until_ready(focal_loss(logits, target, gamma=gamma, eps=eps))
    ref = _focal_loss_ref(logits, target, gamma=gamma, eps=eps)
    assert jnp.allclose(out, ref, rtol=1e-5, atol=1e-5), (out, ref)

    # Case 2: explicit small row tile -> multi-block serial reduction per core.
    out2 = jax.block_until_ready(focal_loss(logits, target, gamma=gamma, eps=eps, tn=8))
    assert jnp.allclose(out2, ref, rtol=1e-5, atol=1e-5), (out2, ref)

    # Case 3: gamma == 0 path (weight == 1).
    out3 = jax.block_until_ready(focal_loss(logits, target, gamma=0.0, eps=eps, tn=8))
    ref3 = _focal_loss_ref(logits, target, gamma=0.0, eps=eps)
    assert jnp.allclose(out3, ref3, rtol=1e-5, atol=1e-5), (out3, ref3)

    # Case 4: N not a multiple of the sublane tile and C not a multiple of 128
    # -> exercises wrapper-side row padding + in-kernel padded-row masking and
    #    lane-padded reductions.
    N2, C2 = 20, 100
    k3, k4 = jax.random.split(k1)
    logits2 = jax.random.normal(k3, (N2, C2), dtype=jnp.float32)
    target2 = jax.random.randint(k4, (N2,), 0, C2, dtype=jnp.int32)
    out4 = jax.block_until_ready(focal_loss(logits2, target2, gamma=gamma, eps=eps, tn=8))
    ref4 = _focal_loss_ref(logits2, target2, gamma=gamma, eps=eps)
    assert jnp.allclose(out4, ref4, rtol=1e-5, atol=1e-5), (out4, ref4)

    # Case 5: bf16 logits (in-kernel upcast) with an explicit 2-way core split.
    logits_bf = logits.astype(jnp.bfloat16)
    out5 = jax.block_until_ready(
        focal_loss(logits_bf, target, gamma=gamma, eps=eps, num_cores=2))
    ref5 = _focal_loss_ref(logits_bf, target, gamma=gamma, eps=eps)
    assert jnp.allclose(out5, ref5, rtol=1e-3, atol=1e-3), (out5, ref5)

    print("KERNEL_OK")
</pallas_src>

<mosaic_0001>
module attributes {stable_mosaic.version = 11 : i64} {
  func.func @_focal_loss_kernel(%arg0: i32, %arg1: i32, %arg2: memref<16x32xf32, #tpu.memory_space<vmem>>, %arg3: memref<16x1xi32, #tpu.memory_space<vmem>>, %arg4: memref<1x1x1xf32, #tpu.memory_space<vmem>>, %arg5: memref<16x1xf32, #tpu.memory_space<vmem>>) attributes {dimension_semantics = [#tpu.dimension_semantics<parallel>, #tpu.dimension_semantics<arbitrary>], iteration_bounds = array<i64: 1, 1>, scalar_prefetch = 0 : i64, scratch_operands = 1 : i64, tpu.core_type = #tpu.core_type<tc>, window_params = [{transform_indices = @transform_0, window_bounds = array<i64: 16, 32>}, {transform_indices = @transform_1, window_bounds = array<i64: 16, 1>}, {transform_indices = @transform_2, window_bounds = array<i64: 1, 1, 1>}]} {
    %c0_i32 = arith.constant 0 : i32
    %0 = arith.cmpi eq, %arg1, %c0_i32 : i32
    %1 = arith.extui %0 : i1 to i32
    %c0_i32_0 = arith.constant 0 : i32
    %2 = arith.cmpi ne, %1, %c0_i32_0 : i32
    scf.if %2 {
      %cst_17 = arith.constant 0.000000e+00 : f32
      %38 = vector.broadcast %cst_17 : f32 to vector<16x1xf32>
      %c0_18 = arith.constant 0 : index
      %c0_19 = arith.constant 0 : index
      %39 = vector.load %arg5[%c0_18, %c0_19] : memref<16x1xf32, #tpu.memory_space<vmem>>, vector<16x1xf32>
      tpu.vector_store %arg5[%c0_18, %c0_19], %38 {strides = array<i32>} : memref<16x1xf32, #tpu.memory_space<vmem>>, vector<16x1xf32>,
    } else {
    }
    %c0 = arith.constant 0 : index
    %c0_1 = arith.constant 0 : index
    %3 = vector.load %arg2[%c0, %c0_1] : memref<16x32xf32, #tpu.memory_space<vmem>>, vector<16x32xf32>
    %c0_2 = arith.constant 0 : index
    %c0_3 = arith.constant 0 : index
    %4 = vector.load %arg3[%c0_2, %c0_3] : memref<16x1xi32, #tpu.memory_space<vmem>>, vector<16x1xi32>
    %cst = arith.constant dense<0xFF800000> : vector<16xf32>
    %5 = vector.multi_reduction <maximumf>, %3, %cst [1] : vector<16x32xf32> to vector<16xf32>
    %6 = vector.shape_cast %5 : vector<16xf32> to vector<16x1xf32>
    %7 = vector.broadcast %6 : vector<16x1xf32> to vector<16x32xf32>
    %8 = arith.subf %3, %7 : vector<16x32xf32>
    %9 = math.exp %8 : vector<16x32xf32>
    %cst_4 = arith.constant dense<0.000000e+00> : vector<16xf32>
    %10 = vector.multi_reduction <add>, %9, %cst_4 [1] : vector<16x32xf32> to vector<16xf32>
    %11 = vector.shape_cast %10 : vector<16xf32> to vector<16x1xf32>
    %12 = tpu.iota {dimensions = array<i32: 1>} : vector<1x32xi32>
    %13 = vector.broadcast %12 : vector<1x32xi32> to vector<16x32xi32>
    %14 = vector.broadcast %4 : vector<16x1xi32> to vector<16x32xi32>
    %15 = arith.cmpi eq, %13, %14 : vector<16x32xi32>
    %cst_5 = arith.constant 0.000000e+00 : f32
    %16 = vector.broadcast %cst_5 : f32 to vector<16x32xf32>
    %17 = arith.select %15, %9, %16 : vector<16x32xi1>, vector<16x32xf32>
    %cst_6 = arith.constant dense<0.000000e+00> : vector<16xf32>
    %18 = vector.multi_reduction <add>, %17, %cst_6 [1] : vector<16x32xf32> to vector<16xf32>
    %19 = vector.shape_cast %18 : vector<16xf32> to vector<16x1xf32>
    %20 = arith.divf %19, %11 : vector<16x1xf32>
    %cst_7 = arith.constant 1.000000e-07 : f32
    %cst_8 = arith.constant 0.99999988 : f32
    %21 = vector.broadcast %cst_7 : f32 to vector<16x1xf32>
    %22 = arith.maximumf %21, %20 : vector<16x1xf32>
    %23 = vector.broadcast %cst_8 : f32 to vector<16x1xf32>
    %24 = arith.minimumf %23, %22 : vector<16x1xf32>
    %25 = math.log %24 : vector<16x1xf32>
    %cst_9 = arith.constant 0.000000e+00 : f32
    %26 = vector.broadcast %cst_9 : f32 to vector<16x1xf32>
    %27 = arith.subf %26, %25 : vector<16x1xf32>
    %cst_10 = arith.constant 1.000000e+00 : f32
    %28 = vector.broadcast %cst_10 : f32 to vector<16x1xf32>
    %29 = arith.subf %28, %24 : vector<16x1xf32>
    %30 = arith.mulf %29, %29 : vector<16x1xf32>
    %31 = arith.mulf %27, %30 : vector<16x1xf32>
    %c0_11 = arith.constant 0 : index
    %c0_12 = arith.constant 0 : index
    %32 = vector.load %arg5[%c0_11, %c0_12] : memref<16x1xf32, #tpu.memory_space<vmem>>, vector<16x1xf32>
    %33 = arith.addf %32, %31 : vector<16x1xf32>
    %c0_13 = arith.constant 0 : index
    %c0_14 = arith.constant 0 : index
    %34 = vector.load %arg5[%c0_13, %c0_14] : memref<16x1xf32, #tpu.memory_space<vmem>>, vector<16x1xf32>
    tpu.vector_store %arg5[%c0_13, %c0_14], %33 {strides = array<i32>} : memref<16x1xf32, #tpu.memory_space<vmem>>, vector<16x1xf32>,
    %c0_i32_15 = arith.constant 0 : i32
    %35 = arith.cmpi eq, %arg1, %c0_i32_15 : i32
    %36 = arith.extui %35 : i1 to i32
    %c0_i32_16 = arith.constant 0 : i32
    %37 = arith.cmpi ne, %36, %c0_i32_16 : i32
    scf.if %37 {
      %cst_17 = arith.constant 0.000000e+00 : f32
      %38 = vector.broadcast %cst_17 : f32 to vector<1x1x1xf32>
      %c0_18 = arith.constant 0 : index
      %c0_19 = arith.constant 0 : index
      %39 = vector.load %arg5[%c0_18, %c0_19] : memref<16x1xf32, #tpu.memory_space<vmem>>, vector<16x1xf32>
      %40 = vector.shape_cast %39 : vector<16x1xf32> to vector<1x16x1xf32>
      %cst_20 = arith.constant dense<0.000000e+00> : vector<1xf32>
      %41 = vector.multi_reduction <add>, %40, %cst_20 [1, 2] : vector<1x16x1xf32> to vector<1xf32>
      %42 = vector.shape_cast %41 : vector<1xf32> to vector<1x1x1xf32>
      %43 = vector.extract %42[0, 0, 0] : f32 from vector<1x1x1xf32>
      %44 = vector.broadcast %43 : f32 to vector<1x1x1xf32>
      %45 = arith.addf %38, %44 : vector<1x1x1xf32>
      %c0_21 = arith.constant 0 : index
      %c0_22 = arith.constant 0 : index
      %c0_23 = arith.constant 0 : index
      %46 = vector.load %arg4[%c0_21, %c0_22, %c0_23] : memref<1x1x1xf32, #tpu.memory_space<vmem>>, vector<1x1x1xf32>
      tpu.vector_store %arg4[%c0_21, %c0_22, %c0_23], %45 {strides = array<i32>} : memref<1x1x1xf32, #tpu.memory_space<vmem>>, vector<1x1x1xf32>,
    } else {
    }
    return
  }
  func.func @transform_0(%arg0: i32, %arg1: i32) -> (i32, i32) {
    %c1_i32 = arith.constant 1 : i32
    %0 = arith.muli %arg0, %c1_i32 : i32
    %1 = arith.addi %0, %arg1 : i32
    %c0_i32 = arith.constant 0 : i32
    %c0_i32_0 = arith.constant 0 : i32
    return %1, %c0_i32 : i32, i32
  }
  func.func @transform_1(%arg0: i32, %arg1: i32) -> (i32, i32) {
    %c1_i32 = arith.constant 1 : i32
    %0 = arith.muli %arg0, %c1_i32 : i32
    %1 = arith.addi %0, %arg1 : i32
    %c0_i32 = arith.constant 0 : i32
    %c0_i32_0 = arith.constant 0 : i32
    return %1, %c0_i32 : i32, i32
  }
  func.func @transform_2(%arg0: i32, %arg1: i32) -> (i32, i32, i32) {
    %c0_i32 = arith.constant 0 : i32
    %c0_i32_0 = arith.constant 0 : i32
    %c0_i32_1 = arith.constant 0 : i32
    return %arg0, %c0_i32, %c0_i32_0 : i32, i32, i32
  }
}

</mosaic_0001>

<llo_original>
// kernel: tpu_custom_call.1
$region0: #{tpu_custom_call.1}
  #allocation0 [shape = 'u32[]', space=smem, size = 0x4, offset = 0x4, fixed_abs, tag = 'smem constant byte address 0x4 - core index']
  #allocation1 [shape = 'u32[144,128]{1,0:T(1,128)}', space=vmem, size = 0x12000, scoped, tag = 'internal scratch']
  #allocation2 [shape = 'f32[16,1]{1,0:T(8,128)}', space=vmem, size = 0x2000, scoped, tag = 'scratch operand']
  %s0 = inlined_call_operand.vmem [shape: f32[16,32], index: 0, kind: input, shape index: {}]
  %s1 = inlined_call_operand.vmem [shape: s32[16,1], index: 1, kind: input, shape index: {}]
  %s2 = inlined_call_operand.hbm [shape: f32[1,1,1], index: 2, kind: output, shape index: {}]
  %s3 = sld [smem:[#allocation0]]
  $region26: #{tpu_custom_call.1} parent=0
    _
  %s5 = ssub.s32 1, %s3
  %s6 = scalar_select 0, %s5, %s3
  $region1: #{tpu_custom_call.1} parent=0
    #allocation3 [shape = 'u8[512]{0}', space=vmem, size = 0x400, scoped, tag = 'output window, operand 0, single buffered']
    #allocation4 [shape = 's32[1]{0}', space=sflag, size = 0x4, scoped, tag = 'scoped memory for tpu_custom_call.1']
    %7 = vsyncpa [#allocation4], 0
    // Predicated region
    $region2: #{tpu_custom_call.1} parent=1 // pred_check
      _
    $region3: #{tpu_custom_call.1} parent=1 // pred_check_branch
      %9 = sbr.rel (0) target = $region5
    $region4: #{tpu_custom_call.1} parent=1 // pred_region
      %s10 = sadd.s32 0, 0
      %s11 = smul.u32 2, %s10
      %p12 = scmp.lt.s32.totalorder %s11, 1
      %s13 = scalar_select %p12, %s11, 1
      %s14 = smul.addr %s13, 8
      %s15 = scalar_lea.vmem %s0, %s14
      %s16 = sadd.s32 0, 0
      %s17 = smul.u32 2, %s16
    $region5: #{tpu_custom_call.1} parent=1 // pred_fallthru
      _
    // Predicated region
    $region6: #{tpu_custom_call.1} parent=1 // pred_check
      _
    $region7: #{tpu_custom_call.1} parent=1 // pred_check_branch
      %19 = sbr.rel (0) target = $region9
    $region8: #{tpu_custom_call.1} parent=1 // pred_region
      %s20 = sadd.s32 0, 0
      %s21 = smul.u32 2, %s20
      %p22 = scmp.lt.s32.totalorder %s21, 1
      %s23 = scalar_select %p22, %s21, 1
      %s24 = smul.addr %s23, 8
      %s25 = scalar_lea.vmem %s1, %s24
      %s26 = sadd.s32 0, 0
      %s27 = smul.u32 2, %s26
    $region9: #{tpu_custom_call.1} parent=1 // pred_fallthru
      _
    %s28 = sadd.s32 0, 0
    %s29 = smul.u32 2, %s28
    %p30 = scmp.lt.s32.totalorder %s29, 1
    %s31 = scalar_select %p30, %s29, 1
    %s32 = smul.addr %s31, 8
    %s33 = scalar_lea.vmem %s0, %s32
    %s34 = sadd.s32 0, 0
    %s35 = smul.u32 2, %s34
    %p36 = scmp.lt.s32.totalorder %s35, 1
    %s37 = scalar_select %p36, %s35, 1
    %s38 = smul.addr %s37, 8
    %s39 = scalar_lea.vmem %s1, %s38
    %s40 = sadd.s32 0, 0
    %s41 = smul.u32 2, %s40
    %p42 = scmp.lt.s32.totalorder %s41, 1
    %s43 = scalar_select %p42, %s41, 1
    %s44 = smul.addr %s43, 8
    %s45 = scalar_lea.vmem %s0, %s44
    %s46 = sadd.s32 0, 0
    %s47 = smul.u32 2, %s46
    %s48 = sadd.s32 0, 0
    %s49 = smul.u32 2, %s48
    %p50 = scmp.lt.s32.totalorder %s49, 1
    %s51 = scalar_select %p50, %s49, 1
    %s52 = smul.addr %s51, 8
    %s53 = scalar_lea.vmem %s1, %s52
    %s54 = sadd.s32 0, 0
    %s55 = smul.u32 2, %s54
    %p56 = scmp.eq.s32.totalorder 0, 0
    // Predicated region
    $region10: #{tpu_custom_call.1} parent=1 // pred_check
      %p57 = pneg %p56
    $region11: #{tpu_custom_call.1} parent=1 // pred_check_branch
      %59 = sbr.rel (%p57) target = $region13
    $region12: #{tpu_custom_call.1} parent=1 // pred_region
      %vm60 = vcmask 7168
      %61 = vst.msk [vmem:[#allocation2] sm:$0xff] %vm60, 0.0
      %62 = vst.msk [vmem:[#allocation2 + $0x8] sm:$0xff] %vm60, 0.0
    $region13: #{tpu_custom_call.1} parent=1 // pred_fallthru
      _
    %v63 = vld [vmem:[%s45] sm:$0xff]
    %v64 = vld [vmem:[%s45 + $0x8] sm:$0xff]
    %v65 = vld [vmem:[%s53] sm:$0xff]
    %v66 = vld [vmem:[%s53 + $0x8] sm:$0xff]
    %vm67 = vcmask 261120
    %v68 = vsel %vm67, %v63, -inf
    %69 = vmax.xlane.f32.xlu0 %v68
    %v70 = vpop.xlane.xlu0 %69
    %v71 = vsel %vm67, %v64, -inf
    %72 = vmax.xlane.f32.xlu0 %v71
    %v73 = vpop.xlane.xlu0 %72
    %v74 = vsub.f32 %v63, %v70
    %v75 = vsub.f32 %v64, %v73
    %v76 = vmul.f32 %v74, 1.442695
    %v77 = vpow.pop %v76
    %v78 = vmul.f32 %v75, 1.442695
    %v79 = vpow.pop %v78
    %v80 = vsel %vm67, %v77, 0.0
    %81 = vadd.xlane.f32.xlu0 %v80
    %v82 = vpop.xlane.xlu0 %81
    %v83 = vsel %vm67, %v79, 0.0
    %84 = vadd.xlane.f32.xlu0 %v83
    %v85 = vpop.xlane.xlu0 %84
    %v86 = vlaneseq
    %v87 = vand.u32 %v86, 127
    %88 = vset.pattern.permute.xlu0 0
    %89 = vperm.xlu0 %88, %v65
    %v90 = vpop.permute.xlu0 %89
    %91 = vset.pattern.permute.xlu0 0
    %92 = vperm.xlu0 %91, %v66
    %v93 = vpop.permute.xlu0 %92
    %vm94 = vcmp.eq.s32.totalorder %v87, %v90
    %vm95 = vcmp.eq.s32.totalorder %v87, %v93
    %v96 = vsel %vm94, %v77, 0.0
    %v97 = vsel %vm95, %v79, 0.0
    %v98 = vsel %vm67, %v96, 0.0
    %99 = vadd.xlane.f32.xlu0 %v98
    %v100 = vpop.xlane.xlu0 %99
    %v101 = vsel %vm67, %v97, 0.0
    %102 = vadd.xlane.f32.xlu0 %v101
    %v103 = vpop.xlane.xlu0 %102
    %v104 = vrcp.pop %v82
    %v105 = vmul.f32 %v100, %v104
    %v106 = vrcp.pop %v85
    %v107 = vmul.f32 %v103, %v106
    %v108 = vmax.f32 %v105, 1e-07
    %v109 = vmax.f32 %v107, 1e-07
    %v110 = vmin.f32 %v108, 0.9999999
    %v111 = vmin.f32 %v109, 0.9999999
    %v112 = vlog2.pop %v110
    %v113 = vmul.f32 %v112, 0.6931472
    %v114 = vlog2.pop %v111
    %v115 = vmul.f32 %v114, 0.6931472
    %v116 = vsub.f32 0.0, %v113
    %v117 = vsub.f32 0.0, %v115
    %v118 = vsub.f32 1.0, %v110
    %v119 = vsub.f32 1.0, %v111
    %v120 = vmul.f32 %v118, %v118
    %v121 = vmul.f32 %v119, %v119
    %v122 = vmul.f32 %v116, %v120
    %v123 = vmul.f32 %v117, %v121
    %v124 = vld [vmem:[#allocation2] sm:$0xff]
    %v125 = vld [vmem:[#allocation2 + $0x8] sm:$0xff]
    %v126 = vadd.f32 %v124, %v122
    %v127 = vadd.f32 %v125, %v123
    %vm128 = vcmask 7168
    %129 = vst.msk [vmem:[#allocation2] sm:$0xff] %vm128, %v126
    %130 = vst.msk [vmem:[#allocation2 + $0x8] sm:$0xff] %vm128, %v127
    // Predicated region
    $region14: #{tpu_custom_call.1} parent=1 // pred_check
      %p131 = pneg %p56
    $region15: #{tpu_custom_call.1} parent=1 // pred_check_branch
      %133 = sbr.rel (%p131) target = $region17
    $region16: #{tpu_custom_call.1} parent=1 // pred_region
      %v134 = vld [vmem:[#allocation2] sm:$0xff]
      %v135 = vld [vmem:[#allocation2 + $0x8] sm:$0xff]
      %v136 = vsel %vm128, %v134, 0.0
      %v137 = vsel %vm128, %v135, 0.0
      %v138 = vadd.f32 %v136, %v137
      %139 = vadd.xlane.f32.xlu0 %v138
      %v140 = vpop.xlane.xlu0 %139
      %v141 = vrot.slane %v140, 4
      %v142 = vadd.f32 %v140, %v141
      %v143 = vrot.slane %v142, 2
      %v144 = vadd.f32 %v142, %v143
      %v145 = vrot.slane %v144, 1
      %v146 = vadd.f32 %v144, %v145
      %s147 = vtos %v146
      %v148 = vstv %s147
      %v149 = vadd.f32 %v148, 0.0
      %vm150 = vcmask 0
      %151 = vst.msk [vmem:[#allocation3] sm:$0x1] %vm150, %v149
    $region17: #{tpu_custom_call.1} parent=1 // pred_fallthru
      _
    // Predicated region
    $region18: #{tpu_custom_call.1} parent=1 // pred_check
      _
    $region19: #{tpu_custom_call.1} parent=1 // pred_check_branch
      %153 = sbr.rel (0) target = $region21
    $region20: #{tpu_custom_call.1} parent=1 // pred_region
      %s155 = ssub.s32 16, 16
      %156 = vsyncadd [#allocation4], %s155
      %s158 = sshll.u32 [#allocation3], 4
      %s159 = int_to_ptr.vmem [resolvable:$true] %s158
      %161 = dma.vmem_to_hbm [thread:$0]  %s159, 16, %s2, [#allocation4]
    $region21: #{tpu_custom_call.1} parent=1 // pred_fallthru
      _
    // Predicated region
    $region22: #{tpu_custom_call.1} parent=1 // pred_check
      _
    $region23: #{tpu_custom_call.1} parent=1 // pred_check_branch
      %163 = sbr.rel (0) target = $region25
    $region24: #{tpu_custom_call.1} parent=1 // pred_region
      %164 = dma.done [#allocation4], 16
    $region25: #{tpu_custom_call.1} parent=1 // pred_fallthru
      _
    %165 = vsyncpa [#allocation4], 1

</llo_original>
